<compile_context>
chip_gen: v7x
topology: tpu7x:2x2x1
jax: 0.10.0
libtpu: 0.0.40
codegen_flags: <defaults>
</compile_context>

<pallas_src>
import functools
from math import pi

import jax
import jax.numpy as jnp
import numpy as np
from jax.experimental import pallas as pl
from jax.experimental.pallas import tpu as pltpu


def _round_up(x, m):
    return ((x + m - 1) // m) * m


def _cdiv(a, b):
    return (a + b - 1) // b


def _vmem_budget_bytes():
    """Generation-aware usable-VMEM budget (physical capacity minus headroom)."""
    try:
        cap = int(pltpu.get_tpu_info().vmem_capacity_bytes)
    except Exception:
        cap = 64 * 1024 * 1024          # conservative: v7x per-TensorCore VMEM
    # ~16 MiB (or 25%) headroom for compiler scratch: 64 MiB -> 48, 128 -> 96.
    return max(8 * 1024 * 1024, cap - max(16 * 1024 * 1024, cap // 4))


def _duration_kernel(f_ref, pp_ref, wsc_ref, wtb_ref, o_ref, *,
                     min_value, max_value, matmul_dtype):
    # f_ref:   (TB, 1)   raw (unnormalized) durations, f32
    # pp_ref:  (2, 2H)   row 0: [scale | scale]        scale = pos_w*2*pi/range
    #                    row 1: [phase | phase+pi/2]   phase = -min*scale
    # wsc_ref: (2H, Dp)  fused [sin-rows ; cos-rows] of the Linear weight (transposed)
    # wtb_ref: (2, Dp)   row 0: inv_range * W[:,0]
    #                    row 1: bias - min * inv_range * W[:,0]
    # o_ref:   (TB, Dp)
    fc = jnp.clip(f_ref[...], min_value, max_value)             # (TB, 1)   VPU
    freqs = fc * pp_ref[0:1, :] + pp_ref[1:2, :]                # (TB, 2H)  VPU
    sc = jnp.sin(freqs)                                         # (TB, 2H)  EUP; cos via sin(x+pi/2)
    out = (fc * wtb_ref[0:1, :]                                 # normalized-t column (folded)
           + jnp.dot(sc.astype(matmul_dtype), wsc_ref[...],     # single MXU pass, K = 2H
                     preferred_element_type=jnp.float32)
           + wtb_ref[1:2, :])                                   # folded bias
    o_ref[...] = out.astype(o_ref.dtype)


def prepare_duration_embedder_params(pos_w, lin_w, lin_b, *, min_value, max_value,
                                     weight_dtype=jnp.float32, lane_pad=128):
    """One-time weight preparation (hoisted out of the per-call path).

    pos_w: (H,)          StableAudioPositionalEmbedding weights (H = internal_dim // 2)
    lin_w: (D, 1 + 2H)   torch-layout nn.Linear weight
    lin_b: (D,)          nn.Linear bias
    weight_dtype:        dtype of the matmul weight (bf16 recommended on v6e/v7x)
    """
    half = int(pos_w.shape[0])
    D = int(lin_w.shape[0])
    assert lin_w.shape[1] == 1 + 2 * half, "Linear in_features must be internal_dim + 1"
    D_pad = _round_up(D, lane_pad)

    rng = float(max_value) - float(min_value)
    inv_range = 1.0 / rng

    # Fold 2*pi and the (x - min)/range normalization into scale/phase, and fold
    # cos(x) = sin(x + pi/2) so the kernel evaluates one (TB, 2H) sin, no concat.
    scale = (pos_w.astype(jnp.float32) * (2.0 * pi) * inv_range).reshape(1, half)
    phase = (-float(min_value)) * scale
    scale2 = jnp.concatenate([scale, scale], axis=1)                 # (1, 2H)
    phase2 = jnp.concatenate([phase, phase + (pi / 2.0)], axis=1)    # (1, 2H)
    posw_phase = jnp.concatenate([scale2, phase2], axis=0)           # (2, 2H) f32

    w_t = lin_w[:, 0:1].T.astype(jnp.float32)                        # (1, D)
    w_sc = lin_w[:, 1:].T.astype(jnp.float32)                        # (2H, D) [sin rows ; cos rows]
    bias = lin_b.reshape(1, D).astype(jnp.float32)                   # (1, D)

    # Fold the (clip(x) - min) * inv_range affine into the t-column and bias.
    w_t_f = inv_range * w_t
    bias_f = bias - float(min_value) * w_t_f

    if D_pad != D:   # lane-dense output padding (no-op for real 128-aligned configs)
        padw = ((0, 0), (0, D_pad - D))
        w_sc = jnp.pad(w_sc, padw)
        w_t_f = jnp.pad(w_t_f, padw)
        bias_f = jnp.pad(bias_f, padw)

    wtb = jnp.concatenate([w_t_f, bias_f], axis=0)                   # (2, Dp) f32
    w_sc = w_sc.astype(weight_dtype)                                 # bf16 halves VMEM + MXU passes

    # NOTE(v5e): prefer internal_dim >= 128 in the model config so K = 2H fills
    # the 128-deep MXU contraction; the kernel is correct for any even internal_dim.
    return dict(posw_phase=posw_phase, w_sc=w_sc, wtb=wtb,
                half=half, D=D, D_pad=D_pad,
                min_value=float(min_value), max_value=float(max_value),
                weight_dtype=weight_dtype)


def duration_embedder_apply(floats, params, *, out_dtype=jnp.float32, batch_tile=1024):
    """floats: (B,) durations (seconds).  Returns (B, 1, D) embeddings."""
    floats = floats.reshape(-1)
    B = int(floats.shape[0])
    half = params["half"]
    D = params["D"]
    Dp = params["D_pad"]
    K = 2 * half
    wdt = params["weight_dtype"]
    w_isz = np.dtype(wdt).itemsize
    o_isz = np.dtype(out_dtype).itemsize

    budget = _vmem_budget_bytes()

    # VMEM accounting: resident weights + streaming per-row cost (input/output
    # double-buffered, f32 epilogue temp, (TB,2H) sin intermediates).
    weight_bytes = K * Dp * w_isz + 2 * Dp * 4 + 2 * K * 4
    per_row = 2 * Dp * o_isz + Dp * 4 + 4 * K * 4 + 2 * 4 + 64
    tb_cap = max(8, ((budget - 2 * weight_bytes) // per_row) // 8 * 8)
    cap = max(8, min(batch_tile, tb_cap))

    B8 = _round_up(B, 8)
    # >=2 grid steps for large batches (v7x: both TensorCores get work) and
    # TB = ceil(B8 / n_tiles) so trailing-batch padding stays tiny.
    if B8 <= min(cap, 512):
        n_tiles = 1
    else:
        n_tiles = max(2, _cdiv(B8, cap))
    TB = _round_up(_cdiv(B8, n_tiles), 8)
    n_tiles = _cdiv(B8, TB)
    Bp = n_tiles * TB

    f2d = floats.reshape(B, 1).astype(jnp.float32)
    if Bp != B:
        f2d = jnp.pad(f2d, ((0, Bp - B), (0, 0)))

    kernel = functools.partial(_duration_kernel,
                               min_value=params["min_value"],
                               max_value=params["max_value"],
                               matmul_dtype=wdt)

    block_bytes = 2 * weight_bytes + TB * per_row
    vmem_limit = int(min(budget, max(16 * 1024 * 1024, 2 * block_bytes)))

    cost = pl.CostEstimate(
        flops=2 * Bp * K * Dp + 6 * Bp * (K + Dp),
        transcendentals=Bp * K,
        bytes_accessed=(Bp * 4 + 2 * K * 4 + K * Dp * w_isz
                        + 2 * Dp * 4 + Bp * Dp * o_isz))

    def build(single_buffer_weights):
        wk = {"pipeline_mode": pl.Buffered(1)} if single_buffer_weights else {}
        return pl.pallas_call(
            kernel,
            out_shape=jax.ShapeDtypeStruct((Bp, Dp), out_dtype),
            grid=(n_tiles,),
            in_specs=[
                pl.BlockSpec((TB, 1), lambda i: (i, 0)),          # per-tile durations
                pl.BlockSpec((2, K), lambda i: (0, 0), **wk),     # scale/phase (resident)
                pl.BlockSpec((K, Dp), lambda i: (0, 0), **wk),    # fused sin|cos weight (resident)
                pl.BlockSpec((2, Dp), lambda i: (0, 0), **wk),    # [w_t' ; bias'] (resident)
            ],
            out_specs=pl.BlockSpec((TB, Dp), lambda i: (i, 0)),
            compiler_params=pltpu.CompilerParams(
                dimension_semantics=("parallel",),
                vmem_limit_bytes=vmem_limit),
            cost_estimate=cost)

    args = (f2d, params["posw_phase"], params["w_sc"], params["wtb"])
    try:
        out = build(True)(*args)
    except Exception:
        # Fallback if this jax build rejects Buffered(1) on a pallas_call BlockSpec.
        out = build(False)(*args)

    if Bp != B or Dp != D:
        out = out[:B, :D]          # small copy only when padding occurred
    # torch: embedding.view(-1, 1, number_embedding_dim)
    return out.reshape(B, 1, D)


def _reference(floats, pos_w, lin_w, lin_b, *, min_value, max_value):
    t = jnp.clip(floats, min_value, max_value)
    t = (t - min_value) / (max_value - min_value)
    t = t[..., None]                                      # (B, 1)
    freqs = t * pos_w[None, :] * (2.0 * pi)               # (B, H)
    fouriered = jnp.concatenate([jnp.sin(freqs), jnp.cos(freqs)], axis=-1)
    feats = jnp.concatenate([t, fouriered], axis=-1)      # (B, 1+2H)
    emb = feats @ lin_w.T + lin_b                         # (B, D)
    return emb.reshape(-1, 1, lin_w.shape[0])


if __name__ == "__main__":
    # Small shapes consistent with the module:
    B = 8                      # batch of duration scalars
    internal_dim = 32          # StableAudioPositionalEmbedding dim (even)
    half_dim = internal_dim // 2
    number_embedding_dim = 32  # output embedding dim
    min_value, max_value = 0.0, 30.0

    key = jax.random.PRNGKey(0)
    k1, k2, k3, k4 = jax.random.split(key, 4)

    # deterministic synthetic parameters (shapes from __init__)
    pos_w = jax.random.normal(k1, (half_dim,), dtype=jnp.float32)
    lin_w = jax.random.normal(
        k2, (number_embedding_dim, internal_dim + 1), dtype=jnp.float32) * 0.05
    lin_b = jax.random.normal(k3, (number_embedding_dim,), dtype=jnp.float32) * 0.05

    # durations in seconds, some outside [min, max] to exercise clamping
    floats = jax.random.uniform(k4, (B,), minval=-5.0, maxval=40.0,
                                dtype=jnp.float32)

    ref = _reference(floats, pos_w, lin_w, lin_b,
                     min_value=min_value, max_value=max_value)

    # Exact-dtype path (f32 weights / f32 output) — matches module semantics.
    params_f32 = prepare_duration_embedder_params(
        pos_w, lin_w, lin_b, min_value=min_value, max_value=max_value,
        weight_dtype=jnp.float32)
    out = jax.block_until_ready(
        duration_embedder_apply(floats, params_f32, out_dtype=jnp.float32))
    np.testing.assert_allclose(np.asarray(out), np.asarray(ref),
                               rtol=1e-5, atol=1e-5)
    assert out.shape == (B, 1, number_embedding_dim)

    # Fast path (bf16 MXU weights + bf16 output) — only if downstream accepts bf16.
    params_bf16 = prepare_duration_embedder_params(
        pos_w, lin_w, lin_b, min_value=min_value, max_value=max_value,
        weight_dtype=jnp.bfloat16)
    out_bf16 = jax.block_until_ready(
        duration_embedder_apply(floats, params_bf16, out_dtype=jnp.bfloat16))
    np.testing.assert_allclose(np.asarray(out_bf16, dtype=np.float32),
                               np.asarray(ref), rtol=5e-2, atol=5e-2)

    print("KERNEL_OK")
</pallas_src>

<mosaic_0001>
module attributes {stable_mosaic.version = 11 : i64} {
  func.func @_duration_kernel(%arg0: i32, %arg1: memref<8x1xf32, #tpu.memory_space<vmem>>, %arg2: memref<2x32xf32, #tpu.memory_space<vmem>>, %arg3: memref<32x128xf32, #tpu.memory_space<vmem>>, %arg4: memref<2x128xf32, #tpu.memory_space<vmem>>, %arg5: memref<8x128xf32, #tpu.memory_space<vmem>>) attributes {dimension_semantics = [#tpu.dimension_semantics<parallel>], iteration_bounds = array<i64: 1>, scalar_prefetch = 0 : i64, scratch_operands = 0 : i64, tpu.core_type = #tpu.core_type<tc>, window_params = [{transform_indices = @transform_0, window_bounds = array<i64: 8, 1>}, {pipeline_mode = #tpu.pipeline_mode<synchronous>, transform_indices = @transform_1, window_bounds = array<i64: 2, 32>}, {pipeline_mode = #tpu.pipeline_mode<synchronous>, transform_indices = @transform_2, window_bounds = array<i64: 32, 128>}, {pipeline_mode = #tpu.pipeline_mode<synchronous>, transform_indices = @transform_3, window_bounds = array<i64: 2, 128>}, {transform_indices = @transform_4, window_bounds = array<i64: 8, 128>}]} {
    %c0 = arith.constant 0 : index
    %c0_0 = arith.constant 0 : index
    %0 = vector.load %arg1[%c0, %c0_0] : memref<8x1xf32, #tpu.memory_space<vmem>>, vector<8x1xf32>
    %cst = arith.constant 0.000000e+00 : f32
    %cst_1 = arith.constant 3.000000e+01 : f32
    %1 = vector.broadcast %cst : f32 to vector<8x1xf32>
    %2 = arith.maximumf %1, %0 : vector<8x1xf32>
    %3 = vector.broadcast %cst_1 : f32 to vector<8x1xf32>
    %4 = arith.minimumf %3, %2 : vector<8x1xf32>
    %c0_2 = arith.constant 0 : index
    %c0_3 = arith.constant 0 : index
    %5 = vector.load %arg2[%c0_2, %c0_3] : memref<2x32xf32, #tpu.memory_space<vmem>>, vector<1x32xf32>
    %6 = vector.broadcast %4 : vector<8x1xf32> to vector<8x32xf32>
    %7 = vector.broadcast %5 : vector<1x32xf32> to vector<8x32xf32>
    %8 = arith.mulf %6, %7 : vector<8x32xf32>
    %c1 = arith.constant 1 : index
    %c0_4 = arith.constant 0 : index
    %9 = vector.load %arg2[%c1, %c0_4] : memref<2x32xf32, #tpu.memory_space<vmem>>, vector<1x32xf32>
    %10 = vector.broadcast %9 : vector<1x32xf32> to vector<8x32xf32>
    %11 = arith.addf %8, %10 : vector<8x32xf32>
    %12 = math.sin %11 : vector<8x32xf32>
    %c0_5 = arith.constant 0 : index
    %c0_6 = arith.constant 0 : index
    %13 = vector.load %arg4[%c0_5, %c0_6] : memref<2x128xf32, #tpu.memory_space<vmem>>, vector<1x128xf32>
    %14 = vector.broadcast %4 : vector<8x1xf32> to vector<8x128xf32>
    %15 = vector.broadcast %13 : vector<1x128xf32> to vector<8x128xf32>
    %16 = arith.mulf %14, %15 : vector<8x128xf32>
    %c0_7 = arith.constant 0 : index
    %c0_8 = arith.constant 0 : index
    %17 = vector.load %arg3[%c0_7, %c0_8] : memref<32x128xf32, #tpu.memory_space<vmem>>, vector<32x128xf32>
    %cst_9 = arith.constant dense<0.000000e+00> : vector<8x128xf32>
    %18 = tpu.matmul %12, %17, %cst_9 {dimension_numbers = #tpu.dot_dimension_numbers<[1], [0], [0], [1], [0, 0, 1, 1], [], []>} : vector<8x32xf32>, vector<32x128xf32>, vector<8x128xf32> -> vector<8x128xf32>
    %19 = arith.addf %16, %18 : vector<8x128xf32>
    %c1_10 = arith.constant 1 : index
    %c0_11 = arith.constant 0 : index
    %20 = vector.load %arg4[%c1_10, %c0_11] : memref<2x128xf32, #tpu.memory_space<vmem>>, vector<1x128xf32>
    %21 = vector.broadcast %20 : vector<1x128xf32> to vector<8x128xf32>
    %22 = arith.addf %19, %21 : vector<8x128xf32>
    %c0_12 = arith.constant 0 : index
    %c0_13 = arith.constant 0 : index
    %23 = vector.load %arg5[%c0_12, %c0_13] : memref<8x128xf32, #tpu.memory_space<vmem>>, vector<8x128xf32>
    tpu.vector_store %arg5[%c0_12, %c0_13], %22 {strides = array<i32>} : memref<8x128xf32, #tpu.memory_space<vmem>>, vector<8x128xf32>,
    return
  }
  func.func @transform_0(%arg0: i32) -> (i32, i32) {
    %c0_i32 = arith.constant 0 : i32
    %c0_i32_0 = arith.constant 0 : i32
    return %arg0, %c0_i32 : i32, i32
  }
  func.func @transform_1(%arg0: i32) -> (i32, i32) {
    %c0_i32 = arith.constant 0 : i32
    %c0_i32_0 = arith.constant 0 : i32
    %c0_i32_1 = arith.constant 0 : i32
    return %c0_i32, %c0_i32_0 : i32, i32
  }
  func.func @transform_2(%arg0: i32) -> (i32, i32) {
    %c0_i32 = arith.constant 0 : i32
    %c0_i32_0 = arith.constant 0 : i32
    %c0_i32_1 = arith.constant 0 : i32
    return %c0_i32, %c0_i32_0 : i32, i32
  }
  func.func @transform_3(%arg0: i32) -> (i32, i32) {
    %c0_i32 = arith.constant 0 : i32
    %c0_i32_0 = arith.constant 0 : i32
    %c0_i32_1 = arith.constant 0 : i32
    return %c0_i32, %c0_i32_0 : i32, i32
  }
  func.func @transform_4(%arg0: i32) -> (i32, i32) {
    %c0_i32 = arith.constant 0 : i32
    %c0_i32_0 = arith.constant 0 : i32
    return %arg0, %c0_i32 : i32, i32
  }
}

module attributes {stable_mosaic.version = 11 : i64} {
  func.func @_duration_kernel(%arg0: i32, %arg1: memref<8x1xf32, #tpu.memory_space<vmem>>, %arg2: memref<2x32xf32, #tpu.memory_space<vmem>>, %arg3: memref<32x128xf32, #tpu.memory_space<vmem>>, %arg4: memref<2x128xf32, #tpu.memory_space<vmem>>, %arg5: memref<8x128xf32, #tpu.memory_space<vmem>>) attributes {dimension_semantics = [#tpu.dimension_semantics<parallel>], iteration_bounds = array<i64: 1>, scalar_prefetch = 0 : i64, scratch_operands = 0 : i64, tpu.core_type = #tpu.core_type<tc>, window_params = [{transform_indices = @transform_0, window_bounds = array<i64: 8, 1>}, {pipeline_mode = #tpu.pipeline_mode<synchronous>, transform_indices = @transform_1, window_bounds = array<i64: 2, 32>}, {pipeline_mode = #tpu.pipeline_mode<synchronous>, transform_indices = @transform_2, window_bounds = array<i64: 32, 128>}, {pipeline_mode = #tpu.pipeline_mode<synchronous>, transform_indices = @transform_3, window_bounds = array<i64: 2, 128>}, {transform_indices = @transform_4, window_bounds = array<i64: 8, 128>}]} {
    %c0 = arith.constant 0 : index
    %c0_0 = arith.constant 0 : index
    %0 = vector.load %arg1[%c0, %c0_0] : memref<8x1xf32, #tpu.memory_space<vmem>>, vector<8x1xf32>
    %cst = arith.constant 0.000000e+00 : f32
    %cst_1 = arith.constant 3.000000e+01 : f32
    %1 = vector.broadcast %cst : f32 to vector<8x1xf32>
    %2 = arith.maximumf %1, %0 : vector<8x1xf32>
    %3 = vector.broadcast %cst_1 : f32 to vector<8x1xf32>
    %4 = arith.minimumf %3, %2 : vector<8x1xf32>
    %c0_2 = arith.constant 0 : index
    %c0_3 = arith.constant 0 : index
    %5 = vector.load %arg2[%c0_2, %c0_3] : memref<2x32xf32, #tpu.memory_space<vmem>>, vector<1x32xf32>
    %6 = vector.broadcast %4 : vector<8x1xf32> to vector<8x32xf32>
    %7 = vector.broadcast %5 : vector<1x32xf32> to vector<8x32xf32>
    %8 = arith.mulf %6, %7 : vector<8x32xf32>
    %c1 = arith.constant 1 : index
    %c0_4 = arith.constant 0 : index
    %9 = vector.load %arg2[%c1, %c0_4] : memref<2x32xf32, #tpu.memory_space<vmem>>, vector<1x32xf32>
    %10 = vector.broadcast %9 : vector<1x32xf32> to vector<8x32xf32>
    %11 = arith.addf %8, %10 : vector<8x32xf32>
    %12 = math.sin %11 : vector<8x32xf32>
    %c0_5 = arith.constant 0 : index
    %c0_6 = arith.constant 0 : index
    %13 = vector.load %arg4[%c0_5, %c0_6] : memref<2x128xf32, #tpu.memory_space<vmem>>, vector<1x128xf32>
    %14 = vector.broadcast %4 : vector<8x1xf32> to vector<8x128xf32>
    %15 = vector.broadcast %13 : vector<1x128xf32> to vector<8x128xf32>
    %16 = arith.mulf %14, %15 : vector<8x128xf32>
    %c0_7 = arith.constant 0 : index
    %c0_8 = arith.constant 0 : index
    %17 = vector.load %arg3[%c0_7, %c0_8] : memref<32x128xf32, #tpu.memory_space<vmem>>, vector<32x128xf32>
    %cst_9 = arith.constant dense<0.000000e+00> : vector<8x128xf32>
    %18 = tpu.matmul %12, %17, %cst_9 {dimension_numbers = #tpu.dot_dimension_numbers<[1], [0], [0], [1], [0, 0, 1, 1], [], []>} : vector<8x32xf32>, vector<32x128xf32>, vector<8x128xf32> -> vector<8x128xf32>
    %19 = arith.addf %16, %18 : vector<8x128xf32>
    %c1_10 = arith.constant 1 : index
    %c0_11 = arith.constant 0 : index
    %20 = vector.load %arg4[%c1_10, %c0_11] : memref<2x128xf32, #tpu.memory_space<vmem>>, vector<1x128xf32>
    %21 = vector.broadcast %20 : vector<1x128xf32> to vector<8x128xf32>
    %22 = arith.addf %19, %21 : vector<8x128xf32>
    %c0_12 = arith.constant 0 : index
    %c0_13 = arith.constant 0 : index
    %23 = vector.load %arg5[%c0_12, %c0_13] : memref<8x128xf32, #tpu.memory_space<vmem>>, vector<8x128xf32>
    tpu.vector_store %arg5[%c0_12, %c0_13], %22 {strides = array<i32>} : memref<8x128xf32, #tpu.memory_space<vmem>>, vector<8x128xf32>,
    return
  }
  func.func @transform_0(%arg0: i32) -> (i32, i32) {
    %c0_i32 = arith.constant 0 : i32
    %c0_i32_0 = arith.constant 0 : i32
    return %arg0, %c0_i32 : i32, i32
  }
  func.func @transform_1(%arg0: i32) -> (i32, i32) {
    %c0_i32 = arith.constant 0 : i32
    %c0_i32_0 = arith.constant 0 : i32
    %c0_i32_1 = arith.constant 0 : i32
    return %c0_i32, %c0_i32_0 : i32, i32
  }
  func.func @transform_2(%arg0: i32) -> (i32, i32) {
    %c0_i32 = arith.constant 0 : i32
    %c0_i32_0 = arith.constant 0 : i32
    %c0_i32_1 = arith.constant 0 : i32
    return %c0_i32, %c0_i32_0 : i32, i32
  }
  func.func @transform_3(%arg0: i32) -> (i32, i32) {
    %c0_i32 = arith.constant 0 : i32
    %c0_i32_0 = arith.constant 0 : i32
    %c0_i32_1 = arith.constant 0 : i32
    return %c0_i32, %c0_i32_0 : i32, i32
  }
  func.func @transform_4(%arg0: i32) -> (i32, i32) {
    %c0_i32 = arith.constant 0 : i32
    %c0_i32_0 = arith.constant 0 : i32
    return %arg0, %c0_i32 : i32, i32
  }
}

</mosaic_0001>

<llo_original>
// kernel: tpu_custom_call.1
$region0: #{tpu_custom_call.1}
  #allocation0 [shape = 'u32[]', space=smem, size = 0x4, offset = 0x4, fixed_abs, tag = 'smem constant byte address 0x4 - core index']
  #allocation1 [shape = 'u32[144,128]{1,0:T(1,128)}', space=vmem, size = 0x12000, scoped, tag = 'internal scratch']
  %s0 = inlined_call_operand.vmem [shape: f32[8,1], index: 0, kind: input, shape index: {}]
  %s1 = inlined_call_operand.vmem [shape: f32[2,32], index: 1, kind: input, shape index: {}]
  %s2 = inlined_call_operand.hbm [shape: f32[32,128], index: 2, kind: input, shape index: {}]
  %s3 = inlined_call_operand.vmem [shape: f32[2,128], index: 3, kind: input, shape index: {}]
  %s4 = inlined_call_operand.hbm [shape: f32[8,128], index: 4, kind: output, shape index: {}]
  %s5 = sld [smem:[#allocation0]]
  $region30: #{tpu_custom_call.1} parent=0
    _
  %s7 = ssub.s32 1, %s5
  %s8 = scalar_select 0, %s7, %s5
  $region1: #{tpu_custom_call.1} parent=0
    #allocation2 [shape = 'u8[16384]{0}', space=vmem, size = 0x4000, scoped, tag = 'input window, operand 2, single buffered']
    #allocation3 [shape = 's32[1]{0}', space=sflag, size = 0x4, scoped, tag = 'scoped memory for tpu_custom_call.1']
    #allocation4 [shape = 's32[1]{0}', space=sflag, size = 0x4, scoped, tag = 'scoped memory for tpu_custom_call.1']
    #allocation5 [shape = 'u8[4096]{0}', space=vmem, size = 0x1000, scoped, tag = 'output window, operand 0, single buffered']
    %9 = vsyncpa [#allocation3], 0
    %10 = vsyncpa [#allocation4], 0
    // Predicated region
    $region2: #{tpu_custom_call.1} parent=1 // pred_check
      _
    $region3: #{tpu_custom_call.1} parent=1 // pred_check_branch
      %12 = sbr.rel (0) target = $region5
    $region4: #{tpu_custom_call.1} parent=1 // pred_region
      _
    $region5: #{tpu_custom_call.1} parent=1 // pred_fallthru
      _
    // Predicated region
    $region6: #{tpu_custom_call.1} parent=1 // pred_check
      _
    $region7: #{tpu_custom_call.1} parent=1 // pred_check_branch
      %14 = sbr.rel (0) target = $region9
    $region8: #{tpu_custom_call.1} parent=1 // pred_region
      _
    $region9: #{tpu_custom_call.1} parent=1 // pred_fallthru
      _
    // Predicated region
    $region10: #{tpu_custom_call.1} parent=1 // pred_check
      _
    $region11: #{tpu_custom_call.1} parent=1 // pred_check_branch
      %16 = sbr.rel (0) target = $region13
    $region12: #{tpu_custom_call.1} parent=1 // pred_region
      %s18 = ssub.s32 512, 512
      %19 = vsyncadd [#allocation3], %s18
      %s20 = sshll.u32 [#allocation2], 4
      %s21 = int_to_ptr.vmem [resolvable:$true] %s20
      %26 = dma.hbm_to_vmem [thread:$0]  %s2, 512, %s21, [#allocation3], 128, 128, 8
    $region13: #{tpu_custom_call.1} parent=1 // pred_fallthru
      _
    // Predicated region
    $region14: #{tpu_custom_call.1} parent=1 // pred_check
      _
    $region15: #{tpu_custom_call.1} parent=1 // pred_check_branch
      %28 = sbr.rel (0) target = $region17
    $region16: #{tpu_custom_call.1} parent=1 // pred_region
      _
    $region17: #{tpu_custom_call.1} parent=1 // pred_fallthru
      _
    // Predicated region
    $region18: #{tpu_custom_call.1} parent=1 // pred_check
      _
    $region19: #{tpu_custom_call.1} parent=1 // pred_check_branch
      %30 = sbr.rel (0) target = $region21
    $region20: #{tpu_custom_call.1} parent=1 // pred_region
      %31 = dma.done [#allocation3], 512
    $region21: #{tpu_custom_call.1} parent=1 // pred_fallthru
      _
    %v32 = vld [vmem:[%s0] sm:$0xff]
    %v33 = vmax.f32 %v32, 0.0
    %v34 = vmin.f32 %v33, 30.0
    %v35 = vld [vmem:[%s1] sm:$0x1]
    %37 = vset.pattern.permute.xlu0 0
    %38 = vperm.xlu0 %37, %v34
    %v39 = vpop.permute.xlu0 %38
    %v41 = vlaneseq
    %v42 = vshrl.u32 %v41, 7
    %v43 = vsub.s32 0, %v42
    %v44 = vrot.slane %v35, %v43
    %v45 = vmul.f32 %v39, %v44
    %v46 = vld [vmem:[%s1 + $0x1] sm:$0x1]
    %v47 = vlaneseq
    %v48 = vshrl.u32 %v47, 7
    %v49 = vsub.s32 0, %v48
    %v50 = vrot.slane %v46, %v49
    %v51 = vadd.f32 %v45, %v50
    %v52 = vand.u32 2147483647, %v51
    %vm53 = vcmp.le.f32.partialorder %v52, 0.7853982
    %vm54 = vcmp.lt.s32.totalorder %v51, 0
    %v55 = vand.u32 %v51, 2139095040
    %v56 = vshrl.u32 %v55, 23
    %v57 = vsub.s32 %v56, 127
    %v58 = vand.u32 2147483647, %v51
    %v59 = vand.u32 %v58, 8388607
    %v60 = vor.u32 %v59, 8388608
    %v61 = vsub.s32 0, %v60
    %v62 = vadd.s32 %v57, 1
    %vm63 = vcmp.gt.s32.totalorder %v62, 0
    %v64 = vsel %vm63, %v62, 0
    %v65 = vshrl.u32 %v64, 5
    %v66 = vand.u32 %v64, 31
    %v67 = vsub.s32 32, %v66
    %v68 = vshrl.u32 683565275, %v67
    %v69 = vshll.u32 683565275, %v66
    %v70 = vshrl.u32 2475754826, %v67
    %v71 = vor.u32 %v69, %v70
    %v72 = vshll.u32 2475754826, %v66
    %v73 = vshrl.u32 2131351028, %v67
    %v74 = vor.u32 %v72, %v73
    %v75 = vshll.u32 2131351028, %v66
    %v76 = vshrl.u32 2102212464, %v67
    %v77 = vor.u32 %v75, %v76
    %v78 = vshll.u32 2102212464, %v66
    %v79 = vshrl.u32 920167782, %v67
    %v80 = vor.u32 %v78, %v79
    %v81 = vshll.u32 920167782, %v66
    %v82 = vshrl.u32 1326507024, %v67
    %v83 = vor.u32 %v81, %v82
    %vm84 = vcmp.lt.s32.totalorder %v65, 1
    %vm85 = vcmp.lt.s32.totalorder %v65, 2
    %vm86 = vcmp.lt.s32.totalorder %v65, 3
    %vm87 = vcmp.lt.s32.totalorder %v65, 4
    %v88 = vsel %vm84, %v68, %v71
    %v89 = vsel %vm87, %v77, 2102212464
    %v90 = vsel %vm86, %v74, %v89
    %v91 = vsel %vm85, %v88, %v90
    %v92 = vsel %vm84, %v71, %v74
    %v93 = vsel %vm87, %v80, 920167782
    %v94 = vsel %vm86, %v77, %v93
    %v95 = vsel %vm85, %v92, %v94
    %v96 = vsel %vm84, %v74, %v77
    %v97 = vsel %vm87, %v83, 1326507024
    %v98 = vsel %vm86, %v80, %v97
    %v99 = vsel %vm85, %v96, %v98
    %v100 = vshll.u32 %v60, 8
    %v101 = vmul.u32.u64.compose %v100, %v99
    %v102 = vextract.low.u32 %v101
    %v103 = vextract.high.u32 %v101
    %v104 = vmul.u32.u64.compose %v100, %v95
    %v105 = vextract.low.u32 %v104
    %v106 = vextract.high.u32 %v104
    %v107 = vmul.u32 %v100, %v91
    %v108 = vadd.s32 %v103, %v105
    %vm109 = vc.u32 %v103, %v105
    %v110 = vadd.s32 %v106, 1
    %v111 = vsel %vm109, %v110, %v106
    %v112 = vadd.s32 %v107, %v111
    %v113 = vadd.s32 %v112, 536870912
    %v114 = vshrl.u32 %v113, 30
    %v115 = vshll.u32 %v114, 30
    %v116 = vsub.s32 %v112, %v115
    %vm117 = vcmp.lt.s32.totalorder %v116, 0
    %v118 = vsub.s32 0, %v116
    %v119 = vsel %vm117, %v118, %v116
    %v120 = vclz %v119
    %v121 = vsub.s32 %v120, 2
    %vm122 = vcmp.gt.s32.totalorder 0, %v121
    %v123 = vsel %vm122, 0, %v121
    %v124 = vsub.s32 32, %v123
    %v125 = vshll.u32 %v116, %v123
    %v126 = vshrl.u32 %v108, %v124
    %v127 = vor.u32 %v125, %v126
    %v128 = vsub.s32 4294967266, %v123
    %v129 = vadd.s32 %v128, 127
    %v130 = vshll.u32 %v129, 23
    %v131 = vor.u32 4788187, %v130
    %v132 = vand.u32 2147483647, %v131
    %v134 = vcvt.s32.f32 %v127
    %v135 = vmul.f32 %v134, %v132
    %v136 = vxor.u32 %v135, 2147483648
    %v137 = vsel %vm54, %v136, %v135
    %v138 = vsub.s32 4, %v114
    %v139 = vsel %vm54, %v138, %v114
    %v140 = vsel %vm53, %v51, %v137
    %v141 = vsel %vm53, 0, %v139
    %v142 = vcosq.f32.pop %v140
    %v143 = vsinq.f32.pop %v140
    %vm144 = vweird.f32 %v51
    %v145 = vadd.s32 %v141, 3
    %v146 = vand.u32 %v145, 3
    %vm147 = vcmp.lt.s32.totalorder %v146, 2
    %vm148 = vcmp.eq.s32.totalorder %v146, 0
    %v149 = vxor.u32 %v143, 2147483648
    %v150 = vsel %vm148, %v142, %v149
    %vm151 = vcmp.eq.s32.totalorder %v146, 2
    %v152 = vxor.u32 %v142, 2147483648
    %v153 = vsel %vm151, %v152, %v143
    %v154 = vsel %vm147, %v150, %v153
    %v155 = vsel %vm144, nan, %v154
    %v156 = vld [vmem:[%s3] sm:$0x1]
    %v157 = vlaneseq
    %v158 = vshrl.u32 %v157, 7
    %v159 = vsub.s32 0, %v158
    %v160 = vrot.slane %v156, %v159
    %v161 = vmul.f32 %v39, %v160
    %v162 = vld [vmem:[#allocation2] sm:$0xff]
    %v163 = vld [vmem:[#allocation2 + $0x8] sm:$0xff]
    %v164 = vld [vmem:[#allocation2 + $0x10] sm:$0xff]
    %v165 = vld [vmem:[#allocation2 + $0x18] sm:$0xff]
    %vm166 = vcmask 261120
    %v168 = vsel %vm166, %v155, 0
    %170 = vmatprep.subr.mxu0 0.0
    %171 = vmatpush1.msra.mxu0 %v162
    %172 = vmatprep.subr.mxu0 0.0
    %173 = vmatpush1.msra.mxu0 %v163
    %174 = vmatprep.subr.mxu0 0.0
    %175 = vmatpush1.msra.mxu0 %v164
    %176 = vmatprep.subr.mxu0 0.0
    %177 = vmatpush1.msra.mxu0 %v165
    %178 = vmatprep.subr.mxu0 0.0
    %179 = vmatpush1.msra.mxu0 0.0
    %180 = vmatprep.subr.mxu0 0.0
    %181 = vmatpush1.msra.mxu0 0.0
    %182 = vmatprep.subr.mxu0 0.0
    %183 = vmatpush1.msra.mxu0 0.0
    %184 = vmatprep.subr.mxu0 0.0
    %185 = vmatpush1.msra.mxu0 0.0
    %186 = vmatprep.subr.mxu0 0.0
    %187 = vmatpush1.msra.mxu0 0.0
    %188 = vmatprep.subr.mxu0 0.0
    %189 = vmatpush1.msra.mxu0 0.0
    %190 = vmatprep.subr.mxu0 0.0
    %191 = vmatpush1.msra.mxu0 0.0
    %192 = vmatprep.subr.mxu0 0.0
    %193 = vmatpush1.msra.mxu0 0.0
    %194 = vmatprep.subr.mxu0 0.0
    %195 = vmatpush1.msra.mxu0 0.0
    %196 = vmatprep.subr.mxu0 0.0
    %197 = vmatpush1.msra.mxu0 0.0
    %198 = vmatprep.subr.mxu0 0.0
    %199 = vmatpush1.msra.mxu0 0.0
    %200 = vmatprep.subr.mxu0 0.0
    %201 = vmatpush1.msra.mxu0 0.0
    %202 = vmatprep.subr.mxu0 0.0
    %203 = vmatpush1.msra.mxu0 0.0
    %204 = vmatprep.subr.mxu0 0.0
    %205 = vmatpush1.msra.mxu0 0.0
    %206 = vmatprep.subr.mxu0 0.0
    %207 = vmatpush1.msra.mxu0 0.0
    %208 = vmatprep.subr.mxu0 0.0
    %209 = vmatpush1.msra.mxu0 0.0
    %210 = vmatprep.subr.mxu0 0.0
    %211 = vmatpush1.msra.mxu0 0.0
    %212 = vmatprep.subr.mxu0 0.0
    %213 = vmatpush1.msra.mxu0 0.0
    %214 = vmatprep.subr.mxu0 0.0
    %215 = vmatpush1.msra.mxu0 0.0
    %216 = vmatprep.subr.mxu0 0.0
    %217 = vmatpush1.msra.mxu0 0.0
    %218 = vmatprep.subr.mxu0 0.0
    %219 = vmatpush1.msra.mxu0 0.0
    %220 = vmatprep.subr.mxu0 0.0
    %221 = vmatpush1.msra.mxu0 0.0
    %222 = vmatprep.subr.mxu0 0.0
    %223 = vmatpush1.msra.mxu0 0.0
    %224 = vmatprep.subr.mxu0 0.0
    %225 = vmatpush1.msra.mxu0 0.0
    %226 = vmatprep.subr.mxu0 0.0
    %227 = vmatpush1.msra.mxu0 0.0
    %228 = vmatprep.subr.mxu0 0.0
    %229 = vmatpush1.msra.mxu0 0.0
    %230 = vmatprep.subr.mxu0 0.0
    %231 = vmatpush1.msra.mxu0 0.0
    %232 = vmatprep.subr.mxu0 0.0
    %233 = vmatpush1.msra.mxu0 0.0
    %234 = vmatprep.mubr.f32.mxu0 0.0
    %235 = vmatmul.mubr.f32.gmra.mrb[0].mxu0 %v168
    %v236 = vpop.f32.mrb[0].mxu0
    %v237 = vadd.f32 0.0, %v236
    %v238 = vpop.f32.mrb[0].mxu0
    %239 = vdwg.mxu0
    %v240 = vadd.f32 %v161, %v237
    %v241 = vld [vmem:[%s3 + $0x1] sm:$0x1]
    %v242 = vlaneseq
    %v243 = vshrl.u32 %v242, 7
    %v244 = vsub.s32 0, %v243
    %v245 = vrot.slane %v241, %v244
    %v246 = vadd.f32 %v240, %v245
    %247 = vst [vmem:[#allocation5] sm:$0xff] %v246
    // Predicated region
    $region22: #{tpu_custom_call.1} parent=1 // pred_check
      _
    $region23: #{tpu_custom_call.1} parent=1 // pred_check_branch
      %249 = sbr.rel (0) target = $region25
    $region24: #{tpu_custom_call.1} parent=1 // pred_region
      %s251 = ssub.s32 128, 128
      %252 = vsyncadd [#allocation4], %s251
      %s254 = sshll.u32 [#allocation5], 4
      %s255 = int_to_ptr.vmem [resolvable:$true] %s254
      %257 = dma.vmem_to_hbm [thread:$0]  %s255, 128, %s4, [#allocation4]
    $region25: #{tpu_custom_call.1} parent=1 // pred_fallthru
      _
    // Predicated region
    $region26: #{tpu_custom_call.1} parent=1 // pred_check
      _
    $region27: #{tpu_custom_call.1} parent=1 // pred_check_branch
      %259 = sbr.rel (0) target = $region29
    $region28: #{tpu_custom_call.1} parent=1 // pred_region
      %260 = dma.done [#allocation4], 128
    $region29: #{tpu_custom_call.1} parent=1 // pred_fallthru
      _
    %261 = vsyncpa [#allocation3], 1
    %262 = vsyncpa [#allocation4], 1

// kernel: tpu_custom_call.1
$region0: #{tpu_custom_call.1}
  #allocation0 [shape = 'u32[]', space=smem, size = 0x4, offset = 0x4, fixed_abs, tag = 'smem constant byte address 0x4 - core index']
  #allocation1 [shape = 'u32[144,128]{1,0:T(1,128)}', space=vmem, size = 0x12000, scoped, tag = 'internal scratch']
  %s0 = inlined_call_operand.vmem [shape: f32[8,1], index: 0, kind: input, shape index: {}]
  %s1 = inlined_call_operand.vmem [shape: f32[2,32], index: 1, kind: input, shape index: {}]
  %s2 = inlined_call_operand.hbm [shape: f32[32,128], index: 2, kind: input, shape index: {}]
  %s3 = inlined_call_operand.vmem [shape: f32[2,128], index: 3, kind: input, shape index: {}]
  %s4 = inlined_call_operand.hbm [shape: f32[8,128], index: 4, kind: output, shape index: {}]
  %s5 = sld [smem:[#allocation0]]
  $region30: #{tpu_custom_call.1} parent=0
    _
  %s7 = ssub.s32 1, %s5
  %s8 = scalar_select 0, %s7, %s5
  $region1: #{tpu_custom_call.1} parent=0
    #allocation2 [shape = 'u8[16384]{0}', space=vmem, size = 0x4000, scoped, tag = 'input window, operand 2, single buffered']
    #allocation3 [shape = 's32[1]{0}', space=sflag, size = 0x4, scoped, tag = 'scoped memory for tpu_custom_call.1']
    #allocation4 [shape = 's32[1]{0}', space=sflag, size = 0x4, scoped, tag = 'scoped memory for tpu_custom_call.1']
    #allocation5 [shape = 'u8[4096]{0}', space=vmem, size = 0x1000, scoped, tag = 'output window, operand 0, single buffered']
    %9 = vsyncpa [#allocation3], 0
    %10 = vsyncpa [#allocation4], 0
    // Predicated region
    $region2: #{tpu_custom_call.1} parent=1 // pred_check
      _
    $region3: #{tpu_custom_call.1} parent=1 // pred_check_branch
      %12 = sbr.rel (0) target = $region5
    $region4: #{tpu_custom_call.1} parent=1 // pred_region
      _
    $region5: #{tpu_custom_call.1} parent=1 // pred_fallthru
      _
    // Predicated region
    $region6: #{tpu_custom_call.1} parent=1 // pred_check
      _
    $region7: #{tpu_custom_call.1} parent=1 // pred_check_branch
      %14 = sbr.rel (0) target = $region9
    $region8: #{tpu_custom_call.1} parent=1 // pred_region
      _
    $region9: #{tpu_custom_call.1} parent=1 // pred_fallthru
      _
    // Predicated region
    $region10: #{tpu_custom_call.1} parent=1 // pred_check
      _
    $region11: #{tpu_custom_call.1} parent=1 // pred_check_branch
      %16 = sbr.rel (0) target = $region13
    $region12: #{tpu_custom_call.1} parent=1 // pred_region
      %s18 = ssub.s32 512, 512
      %19 = vsyncadd [#allocation3], %s18
      %s20 = sshll.u32 [#allocation2], 4
      %s21 = int_to_ptr.vmem [resolvable:$true] %s20
      %26 = dma.hbm_to_vmem [thread:$0]  %s2, 512, %s21, [#allocation3], 128, 128, 8
    $region13: #{tpu_custom_call.1} parent=1 // pred_fallthru
      _
    // Predicated region
    $region14: #{tpu_custom_call.1} parent=1 // pred_check
      _
    $region15: #{tpu_custom_call.1} parent=1 // pred_check_branch
      %28 = sbr.rel (0) target = $region17
    $region16: #{tpu_custom_call.1} parent=1 // pred_region
      _
    $region17: #{tpu_custom_call.1} parent=1 // pred_fallthru
      _
    // Predicated region
    $region18: #{tpu_custom_call.1} parent=1 // pred_check
      _
    $region19: #{tpu_custom_call.1} parent=1 // pred_check_branch
      %30 = sbr.rel (0) target = $region21
    $region20: #{tpu_custom_call.1} parent=1 // pred_region
      %31 = dma.done [#allocation3], 512
    $region21: #{tpu_custom_call.1} parent=1 // pred_fallthru
      _
    %v32 = vld [vmem:[%s0] sm:$0xff]
    %v33 = vmax.f32 %v32, 0.0
    %v34 = vmin.f32 %v33, 30.0
    %v35 = vld [vmem:[%s1] sm:$0x1]
    %37 = vset.pattern.permute.xlu0 0
    %38 = vperm.xlu0 %37, %v34
    %v39 = vpop.permute.xlu0 %38
    %v41 = vlaneseq
    %v42 = vshrl.u32 %v41, 7
    %v43 = vsub.s32 0, %v42
    %v44 = vrot.slane %v35, %v43
    %v45 = vmul.f32 %v39, %v44
    %v46 = vld [vmem:[%s1 + $0x1] sm:$0x1]
    %v47 = vlaneseq
    %v48 = vshrl.u32 %v47, 7
    %v49 = vsub.s32 0, %v48
    %v50 = vrot.slane %v46, %v49
    %v51 = vadd.f32 %v45, %v50
    %v52 = vand.u32 2147483647, %v51
    %vm53 = vcmp.le.f32.partialorder %v52, 0.7853982
    %vm54 = vcmp.lt.s32.totalorder %v51, 0
    %v55 = vand.u32 %v51, 2139095040
    %v56 = vshrl.u32 %v55, 23
    %v57 = vsub.s32 %v56, 127
    %v58 = vand.u32 2147483647, %v51
    %v59 = vand.u32 %v58, 8388607
    %v60 = vor.u32 %v59, 8388608
    %v61 = vsub.s32 0, %v60
    %v62 = vadd.s32 %v57, 1
    %vm63 = vcmp.gt.s32.totalorder %v62, 0
    %v64 = vsel %vm63, %v62, 0
    %v65 = vshrl.u32 %v64, 5
    %v66 = vand.u32 %v64, 31
    %v67 = vsub.s32 32, %v66
    %v68 = vshrl.u32 683565275, %v67
    %v69 = vshll.u32 683565275, %v66
    %v70 = vshrl.u32 2475754826, %v67
    %v71 = vor.u32 %v69, %v70
    %v72 = vshll.u32 2475754826, %v66
    %v73 = vshrl.u32 2131351028, %v67
    %v74 = vor.u32 %v72, %v73
    %v75 = vshll.u32 2131351028, %v66
    %v76 = vshrl.u32 2102212464, %v67
    %v77 = vor.u32 %v75, %v76
    %v78 = vshll.u32 2102212464, %v66
    %v79 = vshrl.u32 920167782, %v67
    %v80 = vor.u32 %v78, %v79
    %v81 = vshll.u32 920167782, %v66
    %v82 = vshrl.u32 1326507024, %v67
    %v83 = vor.u32 %v81, %v82
    %vm84 = vcmp.lt.s32.totalorder %v65, 1
    %vm85 = vcmp.lt.s32.totalorder %v65, 2
    %vm86 = vcmp.lt.s32.totalorder %v65, 3
    %vm87 = vcmp.lt.s32.totalorder %v65, 4
    %v88 = vsel %vm84, %v68, %v71
    %v89 = vsel %vm87, %v77, 2102212464
    %v90 = vsel %vm86, %v74, %v89
    %v91 = vsel %vm85, %v88, %v90
    %v92 = vsel %vm84, %v71, %v74
    %v93 = vsel %vm87, %v80, 920167782
    %v94 = vsel %vm86, %v77, %v93
    %v95 = vsel %vm85, %v92, %v94
    %v96 = vsel %vm84, %v74, %v77
    %v97 = vsel %vm87, %v83, 1326507024
    %v98 = vsel %vm86, %v80, %v97
    %v99 = vsel %vm85, %v96, %v98
    %v100 = vshll.u32 %v60, 8
    %v101 = vmul.u32.u64.compose %v100, %v99
    %v102 = vextract.low.u32 %v101
    %v103 = vextract.high.u32 %v101
    %v104 = vmul.u32.u64.compose %v100, %v95
    %v105 = vextract.low.u32 %v104
    %v106 = vextract.high.u32 %v104
    %v107 = vmul.u32 %v100, %v91
    %v108 = vadd.s32 %v103, %v105
    %vm109 = vc.u32 %v103, %v105
    %v110 = vadd.s32 %v106, 1
    %v111 = vsel %vm109, %v110, %v106
    %v112 = vadd.s32 %v107, %v111
    %v113 = vadd.s32 %v112, 536870912
    %v114 = vshrl.u32 %v113, 30
    %v115 = vshll.u32 %v114, 30
    %v116 = vsub.s32 %v112, %v115
    %vm117 = vcmp.lt.s32.totalorder %v116, 0
    %v118 = vsub.s32 0, %v116
    %v119 = vsel %vm117, %v118, %v116
    %v120 = vclz %v119
    %v121 = vsub.s32 %v120, 2
    %vm122 = vcmp.gt.s32.totalorder 0, %v121
    %v123 = vsel %vm122, 0, %v121
    %v124 = vsub.s32 32, %v123
    %v125 = vshll.u32 %v116, %v123
    %v126 = vshrl.u32 %v108, %v124
    %v127 = vor.u32 %v125, %v126
    %v128 = vsub.s32 4294967266, %v123
    %v129 = vadd.s32 %v128, 127
    %v130 = vshll.u32 %v129, 23
    %v131 = vor.u32 4788187, %v130
    %v132 = vand.u32 2147483647, %v131
    %v134 = vcvt.s32.f32 %v127
    %v135 = vmul.f32 %v134, %v132
    %v136 = vxor.u32 %v135, 2147483648
    %v137 = vsel %vm54, %v136, %v135
    %v138 = vsub.s32 4, %v114
    %v139 = vsel %vm54, %v138, %v114
    %v140 = vsel %vm53, %v51, %v137
    %v141 = vsel %vm53, 0, %v139
    %v142 = vcosq.f32.pop %v140
    %v143 = vsinq.f32.pop %v140
    %vm144 = vweird.f32 %v51
    %v145 = vadd.s32 %v141, 3
    %v146 = vand.u32 %v145, 3
    %vm147 = vcmp.lt.s32.totalorder %v146, 2
    %vm148 = vcmp.eq.s32.totalorder %v146, 0
    %v149 = vxor.u32 %v143, 2147483648
    %v150 = vsel %vm148, %v142, %v149
    %vm151 = vcmp.eq.s32.totalorder %v146, 2
    %v152 = vxor.u32 %v142, 2147483648
    %v153 = vsel %vm151, %v152, %v143
    %v154 = vsel %vm147, %v150, %v153
    %v155 = vsel %vm144, nan, %v154
    %v156 = vld [vmem:[%s3] sm:$0x1]
    %v157 = vlaneseq
    %v158 = vshrl.u32 %v157, 7
    %v159 = vsub.s32 0, %v158
    %v160 = vrot.slane %v156, %v159
    %v161 = vmul.f32 %v39, %v160
    %v162 = vld [vmem:[#allocation2] sm:$0xff]
    %v163 = vld [vmem:[#allocation2 + $0x8] sm:$0xff]
    %v164 = vld [vmem:[#allocation2 + $0x10] sm:$0xff]
    %v165 = vld [vmem:[#allocation2 + $0x18] sm:$0xff]
    %vm166 = vcmask 261120
    %v168 = vsel %vm166, %v155, 0
    %170 = vmatprep.subr.mxu0 0.0
    %171 = vmatpush1.msra.mxu0 %v162
    %172 = vmatprep.subr.mxu0 0.0
    %173 = vmatpush1.msra.mxu0 %v163
    %174 = vmatprep.subr.mxu0 0.0
    %175 = vmatpush1.msra.mxu0 %v164
    %176 = vmatprep.subr.mxu0 0.0
    %177 = vmatpush1.msra.mxu0 %v165
    %178 = vmatprep.subr.mxu0 0.0
    %179 = vmatpush1.msra.mxu0 0.0
    %180 = vmatprep.subr.mxu0 0.0
    %181 = vmatpush1.msra.mxu0 0.0
    %182 = vmatprep.subr.mxu0 0.0
    %183 = vmatpush1.msra.mxu0 0.0
    %184 = vmatprep.subr.mxu0 0.0
    %185 = vmatpush1.msra.mxu0 0.0
    %186 = vmatprep.subr.mxu0 0.0
    %187 = vmatpush1.msra.mxu0 0.0
    %188 = vmatprep.subr.mxu0 0.0
    %189 = vmatpush1.msra.mxu0 0.0
    %190 = vmatprep.subr.mxu0 0.0
    %191 = vmatpush1.msra.mxu0 0.0
    %192 = vmatprep.subr.mxu0 0.0
    %193 = vmatpush1.msra.mxu0 0.0
    %194 = vmatprep.subr.mxu0 0.0
    %195 = vmatpush1.msra.mxu0 0.0
    %196 = vmatprep.subr.mxu0 0.0
    %197 = vmatpush1.msra.mxu0 0.0
    %198 = vmatprep.subr.mxu0 0.0
    %199 = vmatpush1.msra.mxu0 0.0
    %200 = vmatprep.subr.mxu0 0.0
    %201 = vmatpush1.msra.mxu0 0.0
    %202 = vmatprep.subr.mxu0 0.0
    %203 = vmatpush1.msra.mxu0 0.0
    %204 = vmatprep.subr.mxu0 0.0
    %205 = vmatpush1.msra.mxu0 0.0
    %206 = vmatprep.subr.mxu0 0.0
    %207 = vmatpush1.msra.mxu0 0.0
    %208 = vmatprep.subr.mxu0 0.0
    %209 = vmatpush1.msra.mxu0 0.0
    %210 = vmatprep.subr.mxu0 0.0
    %211 = vmatpush1.msra.mxu0 0.0
    %212 = vmatprep.subr.mxu0 0.0
    %213 = vmatpush1.msra.mxu0 0.0
    %214 = vmatprep.subr.mxu0 0.0
    %215 = vmatpush1.msra.mxu0 0.0
    %216 = vmatprep.subr.mxu0 0.0
    %217 = vmatpush1.msra.mxu0 0.0
    %218 = vmatprep.subr.mxu0 0.0
    %219 = vmatpush1.msra.mxu0 0.0
    %220 = vmatprep.subr.mxu0 0.0
    %221 = vmatpush1.msra.mxu0 0.0
    %222 = vmatprep.subr.mxu0 0.0
    %223 = vmatpush1.msra.mxu0 0.0
    %224 = vmatprep.subr.mxu0 0.0
    %225 = vmatpush1.msra.mxu0 0.0
    %226 = vmatprep.subr.mxu0 0.0
    %227 = vmatpush1.msra.mxu0 0.0
    %228 = vmatprep.subr.mxu0 0.0
    %229 = vmatpush1.msra.mxu0 0.0
    %230 = vmatprep.subr.mxu0 0.0
    %231 = vmatpush1.msra.mxu0 0.0
    %232 = vmatprep.subr.mxu0 0.0
    %233 = vmatpush1.msra.mxu0 0.0
    %234 = vmatprep.mubr.f32.mxu0 0.0
    %235 = vmatmul.mubr.f32.gmra.mrb[0].mxu0 %v168
    %v236 = vpop.f32.mrb[0].mxu0
    %v237 = vadd.f32 0.0, %v236
    %v238 = vpop.f32.mrb[0].mxu0
    %239 = vdwg.mxu0
    %v240 = vadd.f32 %v161, %v237
    %v241 = vld [vmem:[%s3 + $0x1] sm:$0x1]
    %v242 = vlaneseq
    %v243 = vshrl.u32 %v242, 7
    %v244 = vsub.s32 0, %v243
    %v245 = vrot.slane %v241, %v244
    %v246 = vadd.f32 %v240, %v245
    %247 = vst [vmem:[#allocation5] sm:$0xff] %v246
    // Predicated region
    $region22: #{tpu_custom_call.1} parent=1 // pred_check
      _
    $region23: #{tpu_custom_call.1} parent=1 // pred_check_branch
      %249 = sbr.rel (0) target = $region25
    $region24: #{tpu_custom_call.1} parent=1 // pred_region
      %s251 = ssub.s32 128, 128
      %252 = vsyncadd [#allocation4], %s251
      %s254 = sshll.u32 [#allocation5], 4
      %s255 = int_to_ptr.vmem [resolvable:$true] %s254
      %257 = dma.vmem_to_hbm [thread:$0]  %s255, 128, %s4, [#allocation4]
    $region25: #{tpu_custom_call.1} parent=1 // pred_fallthru
      _
    // Predicated region
    $region26: #{tpu_custom_call.1} parent=1 // pred_check
      _
    $region27: #{tpu_custom_call.1} parent=1 // pred_check_branch
      %259 = sbr.rel (0) target = $region29
    $region28: #{tpu_custom_call.1} parent=1 // pred_region
      %260 = dma.done [#allocation4], 128
    $region29: #{tpu_custom_call.1} parent=1 // pred_fallthru
      _
    %261 = vsyncpa [#allocation3], 1
    %262 = vsyncpa [#allocation4], 1

</llo_original>
